<compile_context>
chip_gen: v5e
topology: v5e:2x2
jax: 0.10.0
libtpu: 0.0.40
codegen_flags: <defaults>
</compile_context>

<pallas_src>
import functools

import numpy as np
import jax
import jax.numpy as jnp
from jax.experimental import pallas as pl
from jax.experimental.pallas import tpu as pltpu


# ----------------------------------------------------------------------------
# Fused kernel: one image (C, H*W) per grid step
# ----------------------------------------------------------------------------
def _csse_kernel(x_ref, w1_ref, b1_ref, w2_ref, b2_ref, wsp_ref, bsp_ref, o_ref):
    # x_ref: (1, C, HW)  -- channels on sublanes, spatial on lanes (lane-dense)
    x = x_ref[0].astype(jnp.float32)                         # (C, HW)

    # ---- cSE: AdaptiveAvgPool2d(1) -> 1x1 conv -> ReLU -> 1x1 conv -> sigmoid
    pooled = jnp.mean(x, axis=-1, keepdims=True)             # (C, 1)
    z = jnp.dot(w1_ref[...], pooled,
                preferred_element_type=jnp.float32) + b1_ref[...]   # (hid, 1)
    z = jnp.maximum(z, 0.0)                                   # ReLU
    s = jnp.dot(w2_ref[...], z,
                preferred_element_type=jnp.float32) + b2_ref[...]   # (C, 1)
    s = 1.0 / (1.0 + jnp.exp(-s))                             # channel gate

    # ---- sSE: 1x1 conv C->1 -> sigmoid
    q = jnp.dot(wsp_ref[...], x,
                preferred_element_type=jnp.float32) + bsp_ref[...]  # (1, HW)
    q = 1.0 / (1.0 + jnp.exp(-q))                             # spatial gate

    # cSE(x) + sSE(x) == x * (s + q)   (s broadcasts over lanes, q over sublanes)
    o_ref[0] = (x * (s + q)).astype(o_ref.dtype)


# ----------------------------------------------------------------------------
# Wrapper
# ----------------------------------------------------------------------------
def channel_spatial_se(x, params):
    """x: (B, C, H, W) float32 (NCHW, same as the PyTorch module)."""
    B, C, H, W = x.shape
    HW = H * W
    hidden = params["w1"].shape[0]
    x3 = x.reshape(B, C, HW)

    out = pl.pallas_call(
        _csse_kernel,
        out_shape=jax.ShapeDtypeStruct((B, C, HW), x.dtype),
        grid=(B,),
        in_specs=[
            pl.BlockSpec((1, C, HW), lambda b: (b, 0, 0)),     # x (one image)
            pl.BlockSpec((hidden, C), lambda b: (0, 0)),       # cSE conv1 weight
            pl.BlockSpec((hidden, 1), lambda b: (0, 0)),       # cSE conv1 bias
            pl.BlockSpec((C, hidden), lambda b: (0, 0)),       # cSE conv2 weight
            pl.BlockSpec((C, 1), lambda b: (0, 0)),            # cSE conv2 bias
            pl.BlockSpec((1, C), lambda b: (0, 0)),            # sSE conv weight
            pl.BlockSpec((1, 1), lambda b: (0, 0)),            # sSE conv bias
        ],
        out_specs=pl.BlockSpec((1, C, HW), lambda b: (b, 0, 0)),
        compiler_params=pltpu.CompilerParams(
            dimension_semantics=("parallel",)),
    )(x3,
      params["w1"], params["b1"].reshape(hidden, 1),
      params["w2"], params["b2"].reshape(C, 1),
      params["wsp"].reshape(1, C), params["bsp"].reshape(1, 1))

    return out.reshape(B, C, H, W)


# ----------------------------------------------------------------------------
# Pure-JAX reference (mirrors the PyTorch forward exactly)
# ----------------------------------------------------------------------------
def reference(x, p):
    pooled = jnp.mean(x, axis=(2, 3))                                   # (B, C)
    z = jnp.maximum(pooled @ p["w1"].T + p["b1"], 0.0)                  # (B, hid)
    s = jax.nn.sigmoid(z @ p["w2"].T + p["b2"])                         # (B, C)
    cse = x * s[:, :, None, None]
    q = jnp.einsum("bchw,oc->bohw", x, p["wsp"]) + p["bsp"][None, :, None, None]
    sse = x * jax.nn.sigmoid(q)                                         # (B,1,H,W) gate
    return cse + sse


# ----------------------------------------------------------------------------
# Deterministic parameter init (Conv2d 1x1 weights stored as (out, in))
# ----------------------------------------------------------------------------
def init_params(key, C, reduction=4, min_hidden=8):
    hidden = max(C // reduction, min_hidden)
    ks = jax.random.split(key, 6)

    def w(k, fo, fi):
        return jax.random.normal(k, (fo, fi), jnp.float32) / np.sqrt(fi)

    return {
        "w1": w(ks[0], hidden, C),
        "b1": jax.random.normal(ks[1], (hidden,), jnp.float32) * 0.02,
        "w2": w(ks[2], C, hidden),
        "b2": jax.random.normal(ks[3], (C,), jnp.float32) * 0.02,
        "wsp": w(ks[4], 1, C),
        "bsp": jax.random.normal(ks[5], (1,), jnp.float32) * 0.02,
    }


# ----------------------------------------------------------------------------
if __name__ == "__main__":
    # ChannelSpatialSELayer(num_channels=32, reduction_ratio=4)
    B, C, H, W = 2, 32, 16, 16

    key = jax.random.PRNGKey(0)
    kx, kp = jax.random.split(key)
    x = jax.random.normal(kx, (B, C, H, W), jnp.float32)
    params = init_params(kp, C, reduction=4, min_hidden=8)

    fwd = jax.jit(channel_spatial_se)
    out = fwd(x, params)
    jax.block_until_ready(out)

    ref = reference(x, params)
    assert out.shape == (B, C, H, W) and out.dtype == jnp.float32
    assert bool(jnp.all(jnp.isfinite(out)))
    np.testing.assert_allclose(np.asarray(out), np.asarray(ref), rtol=1e-5, atol=1e-5)
    print("KERNEL_OK")
</pallas_src>

<mosaic_0001>
module attributes {stable_mosaic.version = 11 : i64} {
  func.func @_csse_kernel(%arg0: i32, %arg1: memref<1x32x256xf32, #tpu.memory_space<vmem>>, %arg2: memref<8x32xf32, #tpu.memory_space<vmem>>, %arg3: memref<8x1xf32, #tpu.memory_space<vmem>>, %arg4: memref<32x8xf32, #tpu.memory_space<vmem>>, %arg5: memref<32x1xf32, #tpu.memory_space<vmem>>, %arg6: memref<1x32xf32, #tpu.memory_space<vmem>>, %arg7: memref<1x1xf32, #tpu.memory_space<vmem>>, %arg8: memref<1x32x256xf32, #tpu.memory_space<vmem>>) attributes {dimension_semantics = [#tpu.dimension_semantics<parallel>], iteration_bounds = array<i64: 2>, scalar_prefetch = 0 : i64, scratch_operands = 0 : i64, tpu.core_type = #tpu.core_type<tc>, window_params = [{transform_indices = @transform_0, window_bounds = array<i64: 1, 32, 256>}, {pipeline_mode = #tpu.pipeline_mode<synchronous>, transform_indices = @transform_1, window_bounds = array<i64: 8, 32>}, {pipeline_mode = #tpu.pipeline_mode<synchronous>, transform_indices = @transform_2, window_bounds = array<i64: 8, 1>}, {pipeline_mode = #tpu.pipeline_mode<synchronous>, transform_indices = @transform_3, window_bounds = array<i64: 32, 8>}, {pipeline_mode = #tpu.pipeline_mode<synchronous>, transform_indices = @transform_4, window_bounds = array<i64: 32, 1>}, {pipeline_mode = #tpu.pipeline_mode<synchronous>, transform_indices = @transform_5, window_bounds = array<i64: 1, 32>}, {pipeline_mode = #tpu.pipeline_mode<synchronous>, transform_indices = @transform_6, window_bounds = array<i64: 1, 1>}, {transform_indices = @transform_7, window_bounds = array<i64: 1, 32, 256>}]} {
    %c0 = arith.constant 0 : index
    %c0_0 = arith.constant 0 : index
    %c0_1 = arith.constant 0 : index
    %0 = vector.load %arg1[%c0, %c0_0, %c0_1] : memref<1x32x256xf32, #tpu.memory_space<vmem>>, vector<1x32x256xf32>
    %1 = vector.shape_cast %0 : vector<1x32x256xf32> to vector<32x256xf32>
    %cst = arith.constant dense<0.000000e+00> : vector<32xf32>
    %2 = vector.multi_reduction <add>, %1, %cst [1] : vector<32x256xf32> to vector<32xf32>
    %3 = vector.shape_cast %2 : vector<32xf32> to vector<32x1xf32>
    %cst_2 = arith.constant 2.560000e+02 : f32
    %4 = vector.broadcast %cst_2 : f32 to vector<32x1xf32>
    %5 = arith.divf %3, %4 : vector<32x1xf32>
    %c0_3 = arith.constant 0 : index
    %c0_4 = arith.constant 0 : index
    %6 = vector.load %arg2[%c0_3, %c0_4] : memref<8x32xf32, #tpu.memory_space<vmem>>, vector<8x32xf32>
    %cst_5 = arith.constant dense<0.000000e+00> : vector<8x1xf32>
    %7 = tpu.matmul %6, %5, %cst_5 {dimension_numbers = #tpu.dot_dimension_numbers<[1], [0], [0], [1], [0, 0, 1, 1], [], []>} : vector<8x32xf32>, vector<32x1xf32>, vector<8x1xf32> -> vector<8x1xf32>
    %c0_6 = arith.constant 0 : index
    %c0_7 = arith.constant 0 : index
    %8 = vector.load %arg3[%c0_6, %c0_7] : memref<8x1xf32, #tpu.memory_space<vmem>>, vector<8x1xf32>
    %9 = arith.addf %7, %8 : vector<8x1xf32>
    %cst_8 = arith.constant 0.000000e+00 : f32
    %10 = vector.broadcast %cst_8 : f32 to vector<8x1xf32>
    %11 = arith.maximumf %9, %10 : vector<8x1xf32>
    %c0_9 = arith.constant 0 : index
    %c0_10 = arith.constant 0 : index
    %12 = vector.load %arg4[%c0_9, %c0_10] : memref<32x8xf32, #tpu.memory_space<vmem>>, vector<32x8xf32>
    %cst_11 = arith.constant dense<0.000000e+00> : vector<32x1xf32>
    %13 = tpu.matmul %12, %11, %cst_11 {dimension_numbers = #tpu.dot_dimension_numbers<[1], [0], [0], [1], [0, 0, 1, 1], [], []>} : vector<32x8xf32>, vector<8x1xf32>, vector<32x1xf32> -> vector<32x1xf32>
    %c0_12 = arith.constant 0 : index
    %c0_13 = arith.constant 0 : index
    %14 = vector.load %arg5[%c0_12, %c0_13] : memref<32x1xf32, #tpu.memory_space<vmem>>, vector<32x1xf32>
    %15 = arith.addf %13, %14 : vector<32x1xf32>
    %cst_14 = arith.constant 0.000000e+00 : f32
    %16 = vector.broadcast %cst_14 : f32 to vector<32x1xf32>
    %17 = arith.subf %16, %15 : vector<32x1xf32>
    %18 = math.exp %17 : vector<32x1xf32>
    %cst_15 = arith.constant 1.000000e+00 : f32
    %19 = vector.broadcast %cst_15 : f32 to vector<32x1xf32>
    %20 = arith.addf %19, %18 : vector<32x1xf32>
    %cst_16 = arith.constant 1.000000e+00 : f32
    %21 = vector.broadcast %cst_16 : f32 to vector<32x1xf32>
    %22 = arith.divf %21, %20 : vector<32x1xf32>
    %c0_17 = arith.constant 0 : index
    %c0_18 = arith.constant 0 : index
    %23 = vector.load %arg6[%c0_17, %c0_18] : memref<1x32xf32, #tpu.memory_space<vmem>>, vector<1x32xf32>
    %cst_19 = arith.constant dense<0.000000e+00> : vector<1x256xf32>
    %24 = tpu.matmul %23, %1, %cst_19 {dimension_numbers = #tpu.dot_dimension_numbers<[1], [0], [0], [1], [0, 0, 1, 1], [], []>} : vector<1x32xf32>, vector<32x256xf32>, vector<1x256xf32> -> vector<1x256xf32>
    %c0_20 = arith.constant 0 : index
    %c0_21 = arith.constant 0 : index
    %25 = vector.load %arg7[%c0_20, %c0_21] : memref<1x1xf32, #tpu.memory_space<vmem>>, vector<1x1xf32>
    %26 = vector.broadcast %25 : vector<1x1xf32> to vector<1x256xf32>
    %27 = arith.addf %24, %26 : vector<1x256xf32>
    %cst_22 = arith.constant 0.000000e+00 : f32
    %28 = vector.broadcast %cst_22 : f32 to vector<1x256xf32>
    %29 = arith.subf %28, %27 : vector<1x256xf32>
    %30 = math.exp %29 : vector<1x256xf32>
    %cst_23 = arith.constant 1.000000e+00 : f32
    %31 = vector.broadcast %cst_23 : f32 to vector<1x256xf32>
    %32 = arith.addf %31, %30 : vector<1x256xf32>
    %cst_24 = arith.constant 1.000000e+00 : f32
    %33 = vector.broadcast %cst_24 : f32 to vector<1x256xf32>
    %34 = arith.divf %33, %32 : vector<1x256xf32>
    %35 = vector.broadcast %22 : vector<32x1xf32> to vector<32x256xf32>
    %36 = vector.broadcast %34 : vector<1x256xf32> to vector<32x256xf32>
    %37 = arith.addf %35, %36 : vector<32x256xf32>
    %38 = arith.mulf %1, %37 : vector<32x256xf32>
    %c0_25 = arith.constant 0 : index
    %c0_26 = arith.constant 0 : index
    %c0_27 = arith.constant 0 : index
    %39 = vector.load %arg8[%c0_25, %c0_26, %c0_27] : memref<1x32x256xf32, #tpu.memory_space<vmem>>, vector<1x32x256xf32>
    %40 = vector.shape_cast %39 : vector<1x32x256xf32> to vector<32x256xf32>
    %41 = vector.shape_cast %38 : vector<32x256xf32> to vector<1x32x256xf32>
    tpu.vector_store %arg8[%c0_25, %c0_26, %c0_27], %41 {strides = array<i32>} : memref<1x32x256xf32, #tpu.memory_space<vmem>>, vector<1x32x256xf32>,
    return
  }
  func.func @transform_0(%arg0: i32) -> (i32, i32, i32) {
    %c0_i32 = arith.constant 0 : i32
    %c0_i32_0 = arith.constant 0 : i32
    %c0_i32_1 = arith.constant 0 : i32
    return %arg0, %c0_i32, %c0_i32_0 : i32, i32, i32
  }
  func.func @transform_1(%arg0: i32) -> (i32, i32) {
    %c0_i32 = arith.constant 0 : i32
    %c0_i32_0 = arith.constant 0 : i32
    %c0_i32_1 = arith.constant 0 : i32
    return %c0_i32, %c0_i32_0 : i32, i32
  }
  func.func @transform_2(%arg0: i32) -> (i32, i32) {
    %c0_i32 = arith.constant 0 : i32
    %c0_i32_0 = arith.constant 0 : i32
    %c0_i32_1 = arith.constant 0 : i32
    return %c0_i32, %c0_i32_0 : i32, i32
  }
  func.func @transform_3(%arg0: i32) -> (i32, i32) {
    %c0_i32 = arith.constant 0 : i32
    %c0_i32_0 = arith.constant 0 : i32
    %c0_i32_1 = arith.constant 0 : i32
    return %c0_i32, %c0_i32_0 : i32, i32
  }
  func.func @transform_4(%arg0: i32) -> (i32, i32) {
    %c0_i32 = arith.constant 0 : i32
    %c0_i32_0 = arith.constant 0 : i32
    %c0_i32_1 = arith.constant 0 : i32
    return %c0_i32, %c0_i32_0 : i32, i32
  }
  func.func @transform_5(%arg0: i32) -> (i32, i32) {
    %c0_i32 = arith.constant 0 : i32
    %c0_i32_0 = arith.constant 0 : i32
    %c0_i32_1 = arith.constant 0 : i32
    return %c0_i32, %c0_i32_0 : i32, i32
  }
  func.func @transform_6(%arg0: i32) -> (i32, i32) {
    %c0_i32 = arith.constant 0 : i32
    %c0_i32_0 = arith.constant 0 : i32
    %c0_i32_1 = arith.constant 0 : i32
    return %c0_i32, %c0_i32_0 : i32, i32
  }
  func.func @transform_7(%arg0: i32) -> (i32, i32, i32) {
    %c0_i32 = arith.constant 0 : i32
    %c0_i32_0 = arith.constant 0 : i32
    %c0_i32_1 = arith.constant 0 : i32
    return %arg0, %c0_i32, %c0_i32_0 : i32, i32, i32
  }
}

</mosaic_0001>

<llo_original>
// kernel: channel_spatial_se.1
$region0: #{channel_spatial_se.1}
  #allocation0 [shape = 'u32[]', space=smem, size = 0x4, offset = 0x4, fixed_abs, tag = 'smem constant byte address 0x4 - core index']
  #allocation1 [shape = 'u32[72,128]{1,0:T(1,128)}', space=vmem, size = 0x9000, scoped, tag = 'internal scratch']
  #allocation2 [shape = 'f32[1,1]{1,0:T(1,128)S(1)}', space=vmem, size = 0x200, scoped, tag = 'scoped memory for channel_spatial_se.1']
  %s0 = inlined_call_operand.vmem [shape: f32[2,32,256], index: 0, kind: input, shape index: {}]
  %s1 = inlined_call_operand.vmem [shape: f32[8,32], index: 1, kind: input, shape index: {}]
  %s2 = inlined_call_operand.vmem [shape: f32[8,1], index: 2, kind: input, shape index: {}]
  %s3 = inlined_call_operand.vmem [shape: f32[32,8], index: 3, kind: input, shape index: {}]
  %s4 = inlined_call_operand.vmem [shape: f32[32,1], index: 4, kind: input, shape index: {}]
  %s5 = inlined_call_operand.vmem [shape: f32[1,32], index: 5, kind: input, shape index: {}]
  %s6 = inlined_call_operand.<no memory space> [shape: f32[1,1], index: 6, kind: input, shape index: {}]
  %s7 = inlined_call_operand.vmem [shape: f32[2,32,256], index: 7, kind: output, shape index: {}]
  %s8 = sld [smem:[#allocation0]]
  $region61: #{channel_spatial_se.1} parent=0
    _
  %s10 = ssub.s32 1, %s8
  %s11 = scalar_select 0, %s10, %s8
  %v12 = vstv %s6
  %13 = vst [vmem:[#allocation2] sm:$0x1] %v12
  loop: start=0, step=1, limit=4
  $region2: #{channel_spatial_se.1} parent=0 // loop_pre_header
    _
  $region3: #{channel_spatial_se.1} parent=0 // loop_header
    %s15 = sphi 0, %s19
    %p16 = scmp.ge.s32.totalorder %s15, 4
    %s25 = sphi 0, %s27
    %s28 = sphi 0, %s25
    %s29 = sphi 0, %s28
    %s45 = sphi 0, %s29
    %s49 = sphi 0, %s49
    %s51 = sphi 0, %s49
    %s52 = sphi 0, %s51
    %s66 = sphi 0, %s52
    %s70 = sphi 0, %s70
    %s72 = sphi 0, %s70
    %s73 = sphi 0, %s72
    %s87 = sphi 0, %s73
    %s91 = sphi 0, %s91
    %s93 = sphi 0, %s91
    %s94 = sphi 0, %s93
    %s108 = sphi 0, %s94
    %s112 = sphi 0, %s112
    %s114 = sphi 0, %s112
    %s115 = sphi 0, %s114
    %s129 = sphi 0, %s115
    %s133 = sphi 0, %s133
    %s135 = sphi 0, %s133
    %s136 = sphi 0, %s135
    %s150 = sphi 0, %s136
    %s154 = sphi 0, %s154
    %s156 = sphi 0, %s154
    %s157 = sphi 0, %s156
    %s171 = sphi 0, %s157
    %s177 = sphi 0, %s179
    %s180 = sphi 0, %s177
    %s181 = sphi 0, %s180
    %s197 = sphi 0, %s181
  $region4: #{channel_spatial_se.1} parent=0 // loop_header_branch
    %18 = sbr.rel (%p16) target = $region8
  $region5: #{channel_spatial_se.1} parent=0 // loop_body
    %s20 = ssub.s32 %s15, 1
    %s21 = ssub.s32 %s15, 2
    %s22 = sadd.s32 %s15, 1
    %s23 = ssub.s32 %s15, %s22
    %p24 = scmp.eq.s32.totalorder %s23, 0
    %s26 = sadd.s32 %s25, 1
    %s27 = scalar_select %p24, %s25, %s26
    %p30 = pneg %p24
    %p31 = scmp.eq.s32.totalorder %s15, 1
    %p32 = por %p30, %p31
    %p33 = scmp.ne.s32.totalorder %s25, %s28
    %p34 = scmp.eq.s32.totalorder %s15, 0
    %p35 = por %p33, %p34
    %p36 = scmp.ne.s32.totalorder %s25, %s28
    %p37 = scmp.eq.s32.totalorder %s20, 1
    %p38 = por %p36, %p37
    %p39 = scmp.ne.s32.totalorder %s28, %s29
    %p40 = scmp.eq.s32.totalorder %s20, 0
    %p41 = por %p39, %p40
    %p42 = scmp.ne.s32.totalorder %s28, %s29
    %p43 = scmp.eq.s32.totalorder %s21, 1
    %p44 = por %p42, %p43
    %p46 = scmp.ne.s32.totalorder %s29, %s45
    %p47 = scmp.eq.s32.totalorder %s21, 0
    %p48 = por %p46, %p47
    %s50 = sadd.s32 %s49, 1
    %p53 = scmp.eq.s32.totalorder %s15, 1
    %p54 = scmp.ne.s32.totalorder %s49, %s51
    %p55 = scmp.eq.s32.totalorder %s15, 0
    %p56 = por %p54, %p55
    %p57 = scmp.ne.s32.totalorder %s49, %s51
    %p58 = scmp.eq.s32.totalorder %s20, 1
    %p59 = por %p57, %p58
    %p60 = scmp.ne.s32.totalorder %s51, %s52
    %p61 = scmp.eq.s32.totalorder %s20, 0
    %p62 = por %p60, %p61
    %p63 = scmp.ne.s32.totalorder %s51, %s52
    %p64 = scmp.eq.s32.totalorder %s21, 1
    %p65 = por %p63, %p64
    %p67 = scmp.ne.s32.totalorder %s52, %s66
    %p68 = scmp.eq.s32.totalorder %s21, 0
    %p69 = por %p67, %p68
    %s71 = sadd.s32 %s70, 1
    %p74 = scmp.eq.s32.totalorder %s15, 1
    %p75 = scmp.ne.s32.totalorder %s70, %s72
    %p76 = scmp.eq.s32.totalorder %s15, 0
    %p77 = por %p75, %p76
    %p78 = scmp.ne.s32.totalorder %s70, %s72
    %p79 = scmp.eq.s32.totalorder %s20, 1
    %p80 = por %p78, %p79
    %p81 = scmp.ne.s32.totalorder %s72, %s73
    %p82 = scmp.eq.s32.totalorder %s20, 0
    %p83 = por %p81, %p82
    %p84 = scmp.ne.s32.totalorder %s72, %s73
    %p85 = scmp.eq.s32.totalorder %s21, 1
    %p86 = por %p84, %p85
    %p88 = scmp.ne.s32.totalorder %s73, %s87
    %p89 = scmp.eq.s32.totalorder %s21, 0
    %p90 = por %p88, %p89
    %s92 = sadd.s32 %s91, 1
    %p95 = scmp.eq.s32.totalorder %s15, 1
    %p96 = scmp.ne.s32.totalorder %s91, %s93
    %p97 = scmp.eq.s32.totalorder %s15, 0
    %p98 = por %p96, %p97
    %p99 = scmp.ne.s32.totalorder %s91, %s93
    %p100 = scmp.eq.s32.totalorder %s20, 1
    %p101 = por %p99, %p100
    %p102 = scmp.ne.s32.totalorder %s93, %s94
    %p103 = scmp.eq.s32.totalorder %s20, 0
    %p104 = por %p102, %p103
    %p105 = scmp.ne.s32.totalorder %s93, %s94
    %p106 = scmp.eq.s32.totalorder %s21, 1
    %p107 = por %p105, %p106
    %p109 = scmp.ne.s32.totalorder %s94, %s108
    %p110 = scmp.eq.s32.totalorder %s21, 0
    %p111 = por %p109, %p110
    %s113 = sadd.s32 %s112, 1
    %p116 = scmp.eq.s32.totalorder %s15, 1
    %p117 = scmp.ne.s32.totalorder %s112, %s114
    %p118 = scmp.eq.s32.totalorder %s15, 0
    %p119 = por %p117, %p118
    %p120 = scmp.ne.s32.totalorder %s112, %s114
    %p121 = scmp.eq.s32.totalorder %s20, 1
    %p122 = por %p120, %p121
    %p123 = scmp.ne.s32.totalorder %s114, %s115
    %p124 = scmp.eq.s32.totalorder %s20, 0
    %p125 = por %p123, %p124
    %p126 = scmp.ne.s32.totalorder %s114, %s115
    %p127 = scmp.eq.s32.totalorder %s21, 1
    %p128 = por %p126, %p127
    %p130 = scmp.ne.s32.totalorder %s115, %s129
    %p131 = scmp.eq.s32.totalorder %s21, 0
    %p132 = por %p130, %p131
    %s134 = sadd.s32 %s133, 1
    %p137 = scmp.eq.s32.totalorder %s15, 1
    %p138 = scmp.ne.s32.totalorder %s133, %s135
    %p139 = scmp.eq.s32.totalorder %s15, 0
    %p140 = por %p138, %p139
    %p141 = scmp.ne.s32.totalorder %s133, %s135
    %p142 = scmp.eq.s32.totalorder %s20, 1
    %p143 = por %p141, %p142
    %p144 = scmp.ne.s32.totalorder %s135, %s136
    %p145 = scmp.eq.s32.totalorder %s20, 0
    %p146 = por %p144, %p145
    %p147 = scmp.ne.s32.totalorder %s135, %s136
    %p148 = scmp.eq.s32.totalorder %s21, 1
    %p149 = por %p147, %p148
    %p151 = scmp.ne.s32.totalorder %s136, %s150
    %p152 = scmp.eq.s32.totalorder %s21, 0
    %p153 = por %p151, %p152
    %s155 = sadd.s32 %s154, 1
    %p158 = scmp.eq.s32.totalorder %s15, 1
    %p159 = scmp.ne.s32.totalorder %s154, %s156
    %p160 = scmp.eq.s32.totalorder %s15, 0
    %p161 = por %p159, %p160
    %p162 = scmp.ne.s32.totalorder %s154, %s156
    %p163 = scmp.eq.s32.totalorder %s20, 1
    %p164 = por %p162, %p163
    %p165 = scmp.ne.s32.totalorder %s156, %s157
    %p166 = scmp.eq.s32.totalorder %s20, 0
    %p167 = por %p165, %p166
    %p168 = scmp.ne.s32.totalorder %s156, %s157
    %p169 = scmp.eq.s32.totalorder %s21, 1
    %p170 = por %p168, %p169
    %p172 = scmp.ne.s32.totalorder %s157, %s171
    %p173 = scmp.eq.s32.totalorder %s21, 0
    %p174 = por %p172, %p173
    %s175 = ssub.s32 %s15, %s22
    %p176 = scmp.eq.s32.totalorder %s175, 0
    %s178 = sadd.s32 %s177, 1
    %s179 = scalar_select %p176, %s177, %s178
    %p182 = pneg %p176
    %p183 = scmp.eq.s32.totalorder %s15, 1
    %p184 = por %p182, %p183
    %p185 = scmp.ne.s32.totalorder %s177, %s180
    %p186 = scmp.eq.s32.totalorder %s15, 0
    %p187 = por %p185, %p186
    %p188 = scmp.ne.s32.totalorder %s177, %s180
    %p189 = scmp.eq.s32.totalorder %s20, 1
    %p190 = por %p188, %p189
    %p191 = scmp.ne.s32.totalorder %s180, %s181
    %p192 = scmp.eq.s32.totalorder %s20, 0
    %p193 = por %p191, %p192
    %p194 = scmp.ne.s32.totalorder %s180, %s181
    %p195 = scmp.eq.s32.totalorder %s21, 1
    %p196 = por %p194, %p195
    %p198 = scmp.ne.s32.totalorder %s181, %s197
    %p199 = scmp.eq.s32.totalorder %s21, 0
    %p200 = por %p198, %p199
    %p201 = scmp.le.s32.totalorder 1, %s15
    %p202 = scmp.lt.s32.totalorder %s15, 3
    %p203 = pnand %p201, %p202
    %p204 = pneg %p203
    // Predicated region
    $region9: #{channel_spatial_se.1} parent=5 // pred_check
      _
    $region10: #{channel_spatial_se.1} parent=5 // pred_check_branch
      %206 = sbr.rel (%p203) target = $region12
    $region11: #{channel_spatial_se.1} parent=5 // pred_region
      %s207 = ssub.s32 %s15, 1
      // Predicated region
      $region13: #{channel_spatial_se.1} parent=11 // pred_check
        %p208 = pneg %p62
      $region14: #{channel_spatial_se.1} parent=11 // pred_check_branch
        %210 = sbr.rel (%p208) target = $region16
      $region15: #{channel_spatial_se.1} parent=11 // pred_region
        _
      $region16: #{channel_spatial_se.1} parent=11 // pred_fallthru
        _
      // Predicated region
      $region17: #{channel_spatial_se.1} parent=11 // pred_check
        %p211 = pneg %p83
      $region18: #{channel_spatial_se.1} parent=11 // pred_check_branch
        %213 = sbr.rel (%p211) target = $region20
      $region19: #{channel_spatial_se.1} parent=11 // pred_region
        _
      $region20: #{channel_spatial_se.1} parent=11 // pred_fallthru
        _
      // Predicated region
      $region21: #{channel_spatial_se.1} parent=11 // pred_check
        %p214 = pneg %p104
      $region22: #{channel_spatial_se.1} parent=11 // pred_check_branch
        %216 = sbr.rel (%p214) target = $region24
      $region23: #{channel_spatial_se.1} parent=11 // pred_region
        _
      $region24: #{channel_spatial_se.1} parent=11 // pred_fallthru
        _
      // Predicated region
      $region25: #{channel_spatial_se.1} parent=11 // pred_check
        %p217 = pneg %p125
      $region26: #{channel_spatial_se.1} parent=11 // pred_check_branch
        %219 = sbr.rel (%p217) target = $region28
      $region27: #{channel_spatial_se.1} parent=11 // pred_region
        _
      $region28: #{channel_spatial_se.1} parent=11 // pred_fallthru
        _
      // Predicated region
      $region29: #{channel_spatial_se.1} parent=11 // pred_check
        %p220 = pneg %p146
      $region30: #{channel_spatial_se.1} parent=11 // pred_check_branch
        %222 = sbr.rel (%p220) target = $region32
      $region31: #{channel_spatial_se.1} parent=11 // pred_region
        _
      $region32: #{channel_spatial_se.1} parent=11 // pred_fallthru
        _
      // Predicated region
      $region33: #{channel_spatial_se.1} parent=11 // pred_check
        %p223 = pneg %p167
      $region34: #{channel_spatial_se.1} parent=11 // pred_check_branch
        %225 = sbr.rel (%p223) target = $region36
      $region35: #{channel_spatial_se.1} parent=11 // pred_region
        _
      $region36: #{channel_spatial_se.1} parent=11 // pred_fallthru
        _
    $region12: #{channel_spatial_se.1} parent=5 // pred_fallthru
      _
    %p226 = scmp.lt.s32.totalorder %s15, 2
    // Predicated region
    $region37: #{channel_spatial_se.1} parent=5 // pred_check
      %p227 = pneg %p226
    $region38: #{channel_spatial_se.1} parent=5 // pred_check_branch
      %229 = sbr.rel (%p227) target = $region40
    $region39: #{channel_spatial_se.1} parent=5 // pred_region
      // Predicated region
      $region41: #{channel_spatial_se.1} parent=39 // pred_check
        %p230 = pneg %p35
      $region42: #{channel_spatial_se.1} parent=39 // pred_check_branch
        %232 = sbr.rel (%p230) target = $region44
      $region43: #{channel_spatial_se.1} parent=39 // pred_region
        %p233 = scmp.lt.s32.totalorder %s15, 1
        %s234 = scalar_select %p233, %s15, 1
        %s235 = smul.addr %s234, 8
        %s236 = smul.addr %s235, 8
        %s237 = scalar_lea.vmem %s0, %s236
      $region44: #{channel_spatial_se.1} parent=39 // pred_fallthru
        _
    $region40: #{channel_spatial_se.1} parent=5 // pred_fallthru
      _
    %p238 = scmp.le.s32.totalorder 1, %s15
    %p239 = scmp.lt.s32.totalorder %s15, 3
    %p240 = pnand %p238, %p239
    %p241 = pneg %p240
    // Predicated region
    $region45: #{channel_spatial_se.1} parent=5 // pred_check
      _
    $region46: #{channel_spatial_se.1} parent=5 // pred_check_branch
      %243 = sbr.rel (%p240) target = $region48
    $region47: #{channel_spatial_se.1} parent=5 // pred_region
      %s244 = ssub.s32 %s15, 1
      %p245 = scmp.lt.s32.totalorder %s20, 1
      %s246 = scalar_select %p245, %s20, 1
      %s247 = smul.addr %s246, 8
      %s248 = smul.addr %s247, 8
      %s249 = scalar_lea.vmem %s0, %s248
      %p250 = pneg %p41
      %p251 = pneg %p38
      %p252 = pneg %p62
      %p253 = pneg %p59
      %p254 = pneg %p83
      %p255 = pneg %p80
      %p256 = pneg %p104
      %p257 = pneg %p101
      %p258 = pneg %p125
      %p259 = pneg %p122
      %p260 = pneg %p146
      %p261 = pneg %p143
      %p262 = pneg %p167
      %p263 = pneg %p164
      %p264 = pneg %p193
      %p265 = pneg %p190
      %p266 = scmp.lt.s32.totalorder %s20, 1
      %s267 = scalar_select %p266, %s20, 1
      %s268 = smul.addr %s267, 8
      %s269 = smul.addr %s268, 8
      %s270 = scalar_lea.vmem %s7, %s269
      %p271 = scmp.lt.s32.totalorder %s20, 1
      %s272 = scalar_select %p271, %s20, 1
      %s273 = smul.addr %s272, 8
      %s274 = smul.addr %s273, 8
      %s275 = scalar_lea.vmem %s0, %s274
      %p276 = scmp.lt.s32.totalorder %s20, 1
      %s277 = scalar_select %p276, %s20, 1
      %s278 = smul.addr %s277, 8
      %s279 = smul.addr %s278, 8
      %s280 = scalar_lea.vmem %s7, %s279
      %v281 = vld [vmem:[%s275] sm:$0xff]
      %v282 = vld [vmem:[%s275 + $0x8] sm:$0xff]
      %v283 = vld [vmem:[%s275 + $0x10] sm:$0xff]
      %v284 = vld [vmem:[%s275 + $0x18] sm:$0xff]
      %v285 = vld [vmem:[%s275 + $0x20] sm:$0xff]
      %v286 = vld [vmem:[%s275 + $0x28] sm:$0xff]
      %v287 = vld [vmem:[%s275 + $0x30] sm:$0xff]
      %v288 = vld [vmem:[%s275 + $0x38] sm:$0xff]
      %v289 = vadd.f32 %v281, %v282
      %290 = vadd.xlane.f32.xlu0 %v289
      %v291 = vpop.xlane.xlu0 %290
      %v292 = vadd.f32 %v283, %v284
      %293 = vadd.xlane.f32.xlu0 %v292
      %v294 = vpop.xlane.xlu0 %293
      %v295 = vadd.f32 %v285, %v286
      %296 = vadd.xlane.f32.xlu0 %v295
      %v297 = vpop.xlane.xlu0 %296
      %v298 = vadd.f32 %v287, %v288
      %299 = vadd.xlane.f32.xlu0 %v298
      %v300 = vpop.xlane.xlu0 %299
      %v301 = vrcp.pop 256.0
      %v302 = vmul.f32 256.0, %v301
      %v303 = vsub.f32 1.0, %v302
      %v304 = vmul.f32 %v301, %v303
      %v305 = vadd.f32 %v301, %v304
      %vm306 = vweird.f32 %v301
      %v307 = vsel %vm306, %v301, %v305
      %v308 = vmul.f32 %v291, %v307
      %v309 = vmul.f32 %v294, %v307
      %v310 = vmul.f32 %v297, %v307
      %v311 = vmul.f32 %v300, %v307
      %v312 = vld [vmem:[%s1] sm:$0xff]
      %v313 = vld [vmem:[%s2] sm:$0xff]
      %vm314 = vcmask 261120
      %v316 = vsel %vm314, %v312, 0
      %318 = vmatpush.msra.mxu0 0.0
      %319 = vmatpush.msra.mxu0 0.0
      %320 = vmatpush.msra.mxu0 0.0
      %321 = vmatpush.msra.mxu0 0.0
      %322 = vmatpush.msra.mxu0 0.0
      %323 = vmatpush.msra.mxu0 0.0
      %324 = vmatpush.msra.mxu0 0.0
      %325 = vmatpush.msra.mxu0 0.0
      %326 = vmatpush.msra.mxu0 0.0
      %327 = vmatpush.msra.mxu0 0.0
      %328 = vmatpush.msra.mxu0 0.0
      %329 = vmatpush.msra.mxu0 0.0
      %330 = vmatpush.msra.mxu0 %v311
      %331 = vmatpush.msra.mxu0 %v310
      %332 = vmatpush.msra.mxu0 %v309
      %333 = vmatpush.msra.mxu0 %v308
      %334 = vmatmul.f32.gmra.mxu0 %v316
      %v335 = vpop.f32.mrf.mxu0
      %v336 = vadd.f32 %v313, %v335
      %337 = vdwg.mxu0
      %v338 = vmax.f32 %v336, 0.0
      %v339 = vld [vmem:[%s3] sm:$0xff]
      %v340 = vld [vmem:[%s3 + $0x8] sm:$0xff]
      %v341 = vld [vmem:[%s3 + $0x10] sm:$0xff]
      %v342 = vld [vmem:[%s3 + $0x18] sm:$0xff]
      %v343 = vld [vmem:[%s4] sm:$0xff]
      %v344 = vld [vmem:[%s4 + $0x8] sm:$0xff]
      %v345 = vld [vmem:[%s4 + $0x10] sm:$0xff]
      %v346 = vld [vmem:[%s4 + $0x18] sm:$0xff]
      %vm347 = vcmask 64512
      %v349 = vsel %vm347, %v339, 0
      %v352 = vsel %vm347, %v340, 0
      %v355 = vsel %vm347, %v341, 0
      %v358 = vsel %vm347, %v342, 0
      %360 = vmatpush.msra.mxu0 0.0
      %361 = vmatpush.msra.mxu0 0.0
      %362 = vmatpush.msra.mxu0 0.0
      %363 = vmatpush.msra.mxu0 0.0
      %364 = vmatpush.msra.mxu0 0.0
      %365 = vmatpush.msra.mxu0 0.0
      %366 = vmatpush.msra.mxu0 0.0
      %367 = vmatpush.msra.mxu0 0.0
      %368 = vmatpush.msra.mxu0 0.0
      %369 = vmatpush.msra.mxu0 0.0
      %370 = vmatpush.msra.mxu0 0.0
      %371 = vmatpush.msra.mxu0 0.0
      %372 = vmatpush.msra.mxu0 0.0
      %373 = vmatpush.msra.mxu0 0.0
      %374 = vmatpush.msra.mxu0 0.0
      %375 = vmatpush.msra.mxu0 %v338
      %376 = vmatmul.f32.gmra.mxu0 %v349
      %v377 = vpop.f32.mrf.mxu0
      %v378 = vadd.f32 %v343, %v377
      %379 = vmatmul.f32.gmra.mxu0 %v352
      %v380 = vpop.f32.mrf.mxu0
      %v381 = vadd.f32 %v344, %v380
      %382 = vmatmul.f32.gmra.mxu0 %v355
      %v383 = vpop.f32.mrf.mxu0
      %v384 = vadd.f32 %v345, %v383
      %385 = vmatmul.f32.gmra.mxu0 %v358
      %v386 = vpop.f32.mrf.mxu0
      %v387 = vadd.f32 %v346, %v386
      %388 = vdwg.mxu0
      %v389 = vsub.f32 0.0, %v378
      %v390 = vsub.f32 0.0, %v381
      %v391 = vsub.f32 0.0, %v384
      %v392 = vsub.f32 0.0, %v387
      %v393 = vmul.f32 %v389, 1.442695
      %v394 = vpow.pop %v393
      %v395 = vmul.f32 %v390, 1.442695
      %v396 = vpow.pop %v395
      %v397 = vmul.f32 %v391, 1.442695
      %v398 = vpow.pop %v397
      %v399 = vmul.f32 %v392, 1.442695
      %v400 = vpow.pop %v399
      %v401 = vadd.f32 %v394, 1.0
      %v402 = vadd.f32 %v396, 1.0
      %v403 = vadd.f32 %v398, 1.0
      %v404 = vadd.f32 %v400, 1.0
      %v405 = vrcp.pop %v401
      %v406 = vmul.f32 %v401, %v405
      %v407 = vsub.f32 1.0, %v406
      %v408 = vmul.f32 %v405, %v407
      %v409 = vadd.f32 %v405, %v408
      %vm410 = vweird.f32 %v401
      %vm411 = vweird.f32 %v405
      %vm412 = vmor %vm410, %vm411
      %v413 = vsel %vm412, %v405, %v409
      %v414 = vand.u32 2147483647, %v401
      %vm415 = vcmp.eq.f32.partialorder %v414, 8.507059e+37
      %v416 = vand.u32 %v401, 2147483648
      %v417 = vor.u32 1.1754944e-38, %v416
      %v418 = vsel %vm415, %v417, %v413
      %v419 = vmul.f32 1.0, %v418
      %v420 = vrcp.pop %v402
      %v421 = vmul.f32 %v402, %v420
      %v422 = vsub.f32 1.0, %v421
      %v423 = vmul.f32 %v420, %v422
      %v424 = vadd.f32 %v420, %v423
      %vm425 = vweird.f32 %v402
      %vm426 = vweird.f32 %v420
      %vm427 = vmor %vm425, %vm426
      %v428 = vsel %vm427, %v420, %v424
      %v429 = vand.u32 2147483647, %v402
      %vm430 = vcmp.eq.f32.partialorder %v429, 8.507059e+37
      %v431 = vand.u32 %v402, 2147483648
      %v432 = vor.u32 1.1754944e-38, %v431
      %v433 = vsel %vm430, %v432, %v428
      %v434 = vmul.f32 1.0, %v433
      %v435 = vrcp.pop %v403
      %v436 = vmul.f32 %v403, %v435
      %v437 = vsub.f32 1.0, %v436
      %v438 = vmul.f32 %v435, %v437
      %v439 = vadd.f32 %v435, %v438
      %vm440 = vweird.f32 %v403
      %vm441 = vweird.f32 %v435
      %vm442 = vmor %vm440, %vm441
      %v443 = vsel %vm442, %v435, %v439
      %v444 = vand.u32 2147483647, %v403
      %vm445 = vcmp.eq.f32.partialorder %v444, 8.507059e+37
      %v446 = vand.u32 %v403, 2147483648
      %v447 = vor.u32 1.1754944e-38, %v446
      %v448 = vsel %vm445, %v447, %v443
      %v449 = vmul.f32 1.0, %v448
      %v450 = vrcp.pop %v404
      %v451 = vmul.f32 %v404, %v450
      %v452 = vsub.f32 1.0, %v451
      %v453 = vmul.f32 %v450, %v452
      %v454 = vadd.f32 %v450, %v453
      %vm455 = vweird.f32 %v404
      %vm456 = vweird.f32 %v450
      %vm457 = vmor %vm455, %vm456
      %v458 = vsel %vm457, %v450, %v454
      %v459 = vand.u32 2147483647, %v404
      %vm460 = vcmp.eq.f32.partialorder %v459, 8.507059e+37
      %v461 = vand.u32 %v404, 2147483648
      %v462 = vor.u32 1.1754944e-38, %v461
      %v463 = vsel %vm460, %v462, %v458
      %v464 = vmul.f32 1.0, %v463
      %v465 = vld [vmem:[%s5] sm:$0x1]
      %v466 = vld [vmem:[#allocation2] sm:$0x1]
      %468 = vset.pattern.permute.xlu0 0
      %469 = vperm.xlu0 %468, %v466
      %v470 = vpop.permute.xlu0 %469
      %v472 = vperm.slane %v470, 0
      %v474 = vsel %vm314, %v465, 0
      %476 = vmatpush.msra.mxu0 0.0
      %477 = vmatpush.msra.mxu0 0.0
      %478 = vmatpush.msra.mxu0 0.0
      %479 = vmatpush.msra.mxu0 0.0
      %480 = vmatpush.msra.mxu0 0.0
      %481 = vmatpush.msra.mxu0 0.0
      %482 = vmatpush.msra.mxu0 0.0
      %483 = vmatpush.msra.mxu0 0.0
      %484 = vmatpush.msra.mxu0 0.0
      %485 = vmatpush.msra.mxu0 0.0
      %486 = vmatpush.msra.mxu0 0.0
      %487 = vmatpush.msra.mxu0 0.0
      %488 = vmatpush.msra.mxu0 %v287
      %489 = vmatpush.msra.mxu0 %v285
      %490 = vmatpush.msra.mxu0 %v283
      %491 = vmatpush.msra.mxu0 %v281
      %492 = vmatmul.f32.gmra.mxu0 %v474
      %v493 = vpop.f32.mrf.mxu0
      %v494 = vadd.f32 %v472, %v493
      %495 = vdwg.mxu0
      %496 = vmatpush.msra.mxu0 0.0
      %497 = vmatpush.msra.mxu0 0.0
      %498 = vmatpush.msra.mxu0 0.0
      %499 = vmatpush.msra.mxu0 0.0
      %500 = vmatpush.msra.mxu0 0.0
      %501 = vmatpush.msra.mxu0 0.0
      %502 = vmatpush.msra.mxu0 0.0
      %503 = vmatpush.msra.mxu0 0.0
      %504 = vmatpush.msra.mxu0 0.0
      %505 = vmatpush.msra.mxu0 0.0
      %506 = vmatpush.msra.mxu0 0.0
      %507 = vmatpush.msra.mxu0 0.0
      %508 = vmatpush.msra.mxu0 %v288
      %509 = vmatpush.msra.mxu0 %v286
      %510 = vmatpush.msra.mxu0 %v284
      %511 = vmatpush.msra.mxu0 %v282
      %512 = vmatmul.f32.gmra.mxu0 %v474
      %v513 = vpop.f32.mrf.mxu0
      %v514 = vadd.f32 %v472, %v513
      %515 = vdwg.mxu0
      %v516 = vsub.f32 0.0, %v494
      %v517 = vsub.f32 0.0, %v514
      %v518 = vmul.f32 %v516, 1.442695
      %v519 = vpow.pop %v518
      %v520 = vmul.f32 %v517, 1.442695
      %v521 = vpow.pop %v520
      %v522 = vadd.f32 %v519, 1.0
      %v523 = vadd.f32 %v521, 1.0
      %v524 = vrcp.pop %v522
      %v525 = vmul.f32 %v522, %v524
      %v526 = vsub.f32 1.0, %v525
      %v527 = vmul.f32 %v524, %v526
      %v528 = vadd.f32 %v524, %v527
      %vm529 = vweird.f32 %v522
      %vm530 = vweird.f32 %v524
      %vm531 = vmor %vm529, %vm530
      %v532 = vsel %vm531, %v524, %v528
      %v533 = vand.u32 2147483647, %v522
      %vm534 = vcmp.eq.f32.partialorder %v533, 8.507059e+37
      %v535 = vand.u32 %v522, 2147483648
      %v536 = vor.u32 1.1754944e-38, %v535
      %v537 = vsel %vm534, %v536, %v532
      %v538 = vmul.f32 1.0, %v537
      %v539 = vrcp.pop %v523
      %v540 = vmul.f32 %v523, %v539
      %v541 = vsub.f32 1.0, %v540
      %v542 = vmul.f32 %v539, %v541
      %v543 = vadd.f32 %v539, %v542
      %vm544 = vweird.f32 %v523
      %vm545 = vweird.f32 %v539
      %vm546 = vmor %vm544, %vm545
      %v547 = vsel %vm546, %v539, %v543
      %v548 = vand.u32 2147483647, %v523
      %vm549 = vcmp.eq.f32.partialorder %v548, 8.507059e+37
      %v550 = vand.u32 %v523, 2147483648
      %v551 = vor.u32 1.1754944e-38, %v550
      %v552 = vsel %vm549, %v551, %v547
      %v553 = vmul.f32 1.0, %v552
      %555 = vset.pattern.permute.xlu0 0
      %556 = vperm.xlu0 %555, %v419
      %v557 = vpop.permute.xlu0 %556
      %560 = vset.pattern.permute.xlu0 0
      %561 = vperm.xlu0 %560, %v434
      %v562 = vpop.permute.xlu0 %561
      %565 = vset.pattern.permute.xlu0 0
      %566 = vperm.xlu0 %565, %v449
      %v567 = vpop.permute.xlu0 %566
      %570 = vset.pattern.permute.xlu0 0
      %571 = vperm.xlu0 %570, %v464
      %v572 = vpop.permute.xlu0 %571
      %v574 = vperm.slane %v538, 0
      %v575 = vperm.slane %v553, 0
      %v576 = vadd.f32 %v557, %v574
      %v577 = vadd.f32 %v557, %v575
      %v578 = vadd.f32 %v562, %v574
      %v579 = vadd.f32 %v562, %v575
      %v580 = vadd.f32 %v567, %v574
      %v581 = vadd.f32 %v567, %v575
      %v582 = vadd.f32 %v572, %v574
      %v583 = vadd.f32 %v572, %v575
      %v584 = vmul.f32 %v281, %v576
      %v585 = vmul.f32 %v282, %v577
      %v586 = vmul.f32 %v283, %v578
      %v587 = vmul.f32 %v284, %v579
      %v588 = vmul.f32 %v285, %v580
      %v589 = vmul.f32 %v286, %v581
      %v590 = vmul.f32 %v287, %v582
      %v591 = vmul.f32 %v288, %v583
      %592 = vst [vmem:[%s280] sm:$0xff] %v584
      %593 = vst [vmem:[%s280 + $0x8] sm:$0xff] %v585
      %594 = vst [vmem:[%s280 + $0x10] sm:$0xff] %v586
      %595 = vst [vmem:[%s280 + $0x18] sm:$0xff] %v587
      %596 = vst [vmem:[%s280 + $0x20] sm:$0xff] %v588
      %597 = vst [vmem:[%s280 + $0x28] sm:$0xff] %v589
      %598 = vst [vmem:[%s280 + $0x30] sm:$0xff] %v590
      %599 = vst [vmem:[%s280 + $0x38] sm:$0xff] %v591
      %p600 = scmp.lt.s32.totalorder %s20, 1
      %s601 = scalar_select %p600, %s20, 1
      %s602 = smul.addr %s601, 8
      %s603 = smul.addr %s602, 8
      %s604 = scalar_lea.vmem %s7, %s603
      // Predicated region
      $region49: #{channel_spatial_se.1} parent=47 // pred_check
        %p605 = pneg %p190
      $region50: #{channel_spatial_se.1} parent=47 // pred_check_branch
        %607 = sbr.rel (%p605) target = $region52
      $region51: #{channel_spatial_se.1} parent=47 // pred_region
        _
      $region52: #{channel_spatial_se.1} parent=47 // pred_fallthru
        _
    $region48: #{channel_spatial_se.1} parent=5 // pred_fallthru
      _
    %p608 = scmp.le.s32.totalorder 2, %s15
    // Predicated region
    $region53: #{channel_spatial_se.1} parent=5 // pred_check
      %p609 = pneg %p608
    $region54: #{channel_spatial_se.1} parent=5 // pred_check_branch
      %611 = sbr.rel (%p609) target = $region56
    $region55: #{channel_spatial_se.1} parent=5 // pred_region
      %s612 = ssub.s32 %s15, 2
      // Predicated region
      $region57: #{channel_spatial_se.1} parent=55 // pred_check
        %p613 = pneg %p196
      $region58: #{channel_spatial_se.1} parent=55 // pred_check_branch
        %615 = sbr.rel (%p613) target = $region60
      $region59: #{channel_spatial_se.1} parent=55 // pred_region
        %p616 = scmp.lt.s32.totalorder %s21, 1
        %s617 = scalar_select %p616, %s21, 1
        %s618 = smul.addr %s617, 8
        %s619 = smul.addr %s618, 8
        %s620 = scalar_lea.vmem %s7, %s619
      $region60: #{channel_spatial_se.1} parent=55 // pred_fallthru
        _
    $region56: #{channel_spatial_se.1} parent=5 // pred_fallthru
      _
  $region6: #{channel_spatial_se.1} parent=0 // loop_footer
    %s19 = sadd.s32 1, %s15
  $region7: #{channel_spatial_se.1} parent=0 // loop_footer_branch
    %14 = sbr.rel target = $region3
  $region8: #{channel_spatial_se.1} parent=0 // loop_exit
    _

</llo_original>
